<compile_context>
chip_gen: v6e
topology: v6e:2x2x1
jax: 0.10.0
libtpu: 0.0.40
codegen_flags: <defaults>
</compile_context>

<pallas_src>
import jax
import jax.numpy as jnp
from jax.experimental import pallas as pl
from jax.experimental.pallas import tpu as pltpu


def tile_batchnorm_kernel(x_ref, gb_ref, out_ref):
    # x_ref / out_ref: (block_n, block_l) lane-dense slab of the flattened (N, C*HW) view.
    # gb_ref: (2, block_l) packed params, already broadcast per-channel along the
    #         flattened lane axis (row 0 = gamma, row 1 = beta), kept in f32.
    # The reference's tile-wise normalization is discarded before the affine, so the
    # kernel is a pure per-channel affine: out = x * gamma + beta (computed in f32,
    # cast only on the store).
    x = x_ref[...].astype(jnp.float32)
    out_ref[...] = (x * gb_ref[0:1, :] + gb_ref[1:2, :]).astype(out_ref.dtype)


def _pick_block(size, align, target):
    """Largest divisor of `size` that is a multiple of `align` and <= `target`.

    Falls back to the full extent (always a legal TPU block) if no such divisor
    exists or if `size` already fits the target.
    """
    if size <= target:
        return size
    b = (target // align) * align
    while b >= align:
        if size % b == 0:
            return b
        b -= align
    return size


def _vmem_limit_bytes():
    # Generation-aware scoped-VMEM limit: half of physical VMEM, capped at 64 MiB
    # (v5e/v6e: 128 MiB physical -> 64 MiB; v7x: 64 MiB physical -> 32 MiB).
    try:
        cap = pltpu.get_tpu_info().vmem_capacity_bytes
    except Exception:
        cap = 64 * 1024 * 1024  # conservative floor (v7x)
    return min(cap // 2, 64 * 1024 * 1024)


def tile_batchnorm(x, gamma, beta):
    # Matches TileBatchNorm.forward: non-4D inputs pass through untouched.
    if x.ndim != 4:
        return x
    N, C, H, W = x.shape
    HW = H * W
    L = C * HW
    itemsize = jnp.dtype(x.dtype).itemsize

    # Free, contiguous, lane-dense reshape (no HBM transpose pass).
    x_flat = x.reshape(N, L)

    # One-time pre-broadcast of the per-channel params to a single packed f32 slab.
    g_row = jnp.broadcast_to(gamma.astype(jnp.float32)[:, None], (C, HW)).reshape(1, L)
    b_row = jnp.broadcast_to(beta.astype(jnp.float32)[:, None], (C, HW)).reshape(1, L)
    gb = jnp.concatenate([g_row, b_row], axis=0)  # (2, L)

    # Block sizing: ~2-4 MB of x per grid step (amortizes per-step overhead on v7x's
    # 3.2 TB/s HBM; with in+out double buffering this stays well under every
    # generation's VMEM budget).  Blocks are exact divisors -> no ragged edge blocks.
    block_n = _pick_block(N, 8, 8)                     # multiple of 8, or full N
    target_lanes = max(128, (4 * 1024 * 1024) // (block_n * itemsize))
    block_l = _pick_block(L, 128, target_lanes)        # multiple of 128, or full L

    # Lane-block axis OUTER, row-block axis INNER: the param block index is constant
    # across the inner axis, so gamma/beta are DMA'd once per lane block.
    grid = (L // block_l, N // block_n)

    cost = pl.CostEstimate(
        flops=2 * N * L,
        transcendentals=0,
        bytes_accessed=2 * N * L * itemsize + 2 * L * 4,
    )

    out_flat = pl.pallas_call(
        tile_batchnorm_kernel,
        out_shape=jax.ShapeDtypeStruct((N, L), x.dtype),
        grid_spec=pltpu.PrefetchScalarGridSpec(
            num_scalar_prefetch=0,
            grid=grid,
            in_specs=[
                pl.BlockSpec((block_n, block_l), lambda j, i: (i, j)),  # x slab
                pl.BlockSpec((2, block_l), lambda j, i: (0, j)),        # packed gamma/beta
            ],
            out_specs=pl.BlockSpec((block_n, block_l), lambda j, i: (i, j)),
        ),
        compiler_params=pltpu.CompilerParams(
            # Fully independent elementwise blocks -> shardable across v7x's 2 TCs.
            dimension_semantics=("parallel", "parallel"),
            vmem_limit_bytes=_vmem_limit_bytes(),
        ),
        cost_estimate=cost,
    )(x_flat, gb)

    # Free reshape back to NCHW.
    return out_flat.reshape(N, C, H, W)


if __name__ == "__main__":
    key = jax.random.PRNGKey(0)
    N, C, H, W = 2, 4, 16, 16
    kx, kg, kb = jax.random.split(key, 3)
    x = jax.random.normal(kx, (N, C, H, W), dtype=jnp.float32)

    # 1) Module's lazy init on first call: gamma = ones(C), beta = zeros(C).
    gamma = jnp.ones((C,), jnp.float32)
    beta = jnp.zeros((C,), jnp.float32)
    out = jax.block_until_ready(tile_batchnorm(x, gamma, beta))
    ref = x * gamma[None, :, None, None] + beta[None, :, None, None]
    assert out.shape == (N, C, H, W)
    assert jnp.allclose(out, ref, atol=1e-6), "mismatch vs reference semantics (init params)"

    # 2) Non-trivial params to validate the per-channel broadcast along the
    #    flattened lane axis.
    gamma2 = jax.random.normal(kg, (C,), dtype=jnp.float32)
    beta2 = jax.random.normal(kb, (C,), dtype=jnp.float32)
    out2 = jax.block_until_ready(tile_batchnorm(x, gamma2, beta2))
    ref2 = x * gamma2[None, :, None, None] + beta2[None, :, None, None]
    assert jnp.allclose(out2, ref2, atol=1e-5), "mismatch vs reference semantics (random params)"

    # 3) Non-4D passthrough branch of forward().
    y = jax.random.normal(kx, (N, C), dtype=jnp.float32)
    assert tile_batchnorm(y, gamma, beta) is y

    print("KERNEL_OK")
</pallas_src>

<mosaic_0001>
module attributes {stable_mosaic.version = 11 : i64} {
  func.func @tile_batchnorm_kernel(%arg0: i32, %arg1: i32, %arg2: memref<2x1024xf32, #tpu.memory_space<vmem>>, %arg3: memref<2x1024xf32, #tpu.memory_space<vmem>>, %arg4: memref<2x1024xf32, #tpu.memory_space<vmem>>) attributes {dimension_semantics = [#tpu.dimension_semantics<parallel>, #tpu.dimension_semantics<parallel>], iteration_bounds = array<i64: 1, 1>, scalar_prefetch = 0 : i64, scratch_operands = 0 : i64, tpu.core_type = #tpu.core_type<tc>, window_params = [{transform_indices = @transform_0, window_bounds = array<i64: 2, 1024>}, {transform_indices = @transform_1, window_bounds = array<i64: 2, 1024>}, {transform_indices = @transform_2, window_bounds = array<i64: 2, 1024>}]} {
    %c0 = arith.constant 0 : index
    %c0_0 = arith.constant 0 : index
    %0 = vector.load %arg2[%c0, %c0_0] : memref<2x1024xf32, #tpu.memory_space<vmem>>, vector<2x1024xf32>
    %c0_1 = arith.constant 0 : index
    %c0_2 = arith.constant 0 : index
    %1 = vector.load %arg3[%c0_1, %c0_2] : memref<2x1024xf32, #tpu.memory_space<vmem>>, vector<1x1024xf32>
    %2 = vector.broadcast %1 : vector<1x1024xf32> to vector<2x1024xf32>
    %3 = arith.mulf %0, %2 : vector<2x1024xf32>
    %c1 = arith.constant 1 : index
    %c0_3 = arith.constant 0 : index
    %4 = vector.load %arg3[%c1, %c0_3] : memref<2x1024xf32, #tpu.memory_space<vmem>>, vector<1x1024xf32>
    %5 = vector.broadcast %4 : vector<1x1024xf32> to vector<2x1024xf32>
    %6 = arith.addf %3, %5 : vector<2x1024xf32>
    %c0_4 = arith.constant 0 : index
    %c0_5 = arith.constant 0 : index
    %7 = vector.load %arg4[%c0_4, %c0_5] : memref<2x1024xf32, #tpu.memory_space<vmem>>, vector<2x1024xf32>
    tpu.vector_store %arg4[%c0_4, %c0_5], %6 {strides = array<i32>} : memref<2x1024xf32, #tpu.memory_space<vmem>>, vector<2x1024xf32>,
    return
  }
  func.func @transform_0(%arg0: i32, %arg1: i32) -> (i32, i32) {
    %c0_i32 = arith.constant 0 : i32
    return %arg1, %arg0 : i32, i32
  }
  func.func @transform_1(%arg0: i32, %arg1: i32) -> (i32, i32) {
    %c0_i32 = arith.constant 0 : i32
    %c0_i32_0 = arith.constant 0 : i32
    return %c0_i32, %arg0 : i32, i32
  }
  func.func @transform_2(%arg0: i32, %arg1: i32) -> (i32, i32) {
    %c0_i32 = arith.constant 0 : i32
    return %arg1, %arg0 : i32, i32
  }
}

</mosaic_0001>

<llo_original>
// kernel: tpu_custom_call.1
$region0: #{tpu_custom_call.1}
  #allocation0 [shape = 'u32[]', space=smem, size = 0x4, offset = 0x4, fixed_abs, tag = 'smem constant byte address 0x4 - core index']
  #allocation1 [shape = 'u32[144,128]{1,0:T(1,128)}', space=vmem, size = 0x12000, scoped, tag = 'internal scratch']
  %s0 = inlined_call_operand.hbm [shape: f32[2,1024], index: 0, kind: input, shape index: {}]
  %s1 = inlined_call_operand.hbm [shape: f32[2,1024], index: 1, kind: input, shape index: {}]
  %s2 = inlined_call_operand.hbm [shape: f32[2,1024], index: 2, kind: output, shape index: {}]
  %s3 = sld [smem:[#allocation0]]
  $region26: #{tpu_custom_call.1} parent=0
    _
  %s5 = ssub.s32 1, %s3
  %s6 = scalar_select 0, %s5, %s3
  $region1: #{tpu_custom_call.1} parent=0
    #allocation2 [shape = 'u8[8192]{0}', space=vmem, size = 0x2000, scoped, tag = 'input window, operand 0, single buffered']
    #allocation3 [shape = 's32[1]{0}', space=sflag, size = 0x4, scoped, tag = 'scoped memory for tpu_custom_call.1']
    #allocation4 [shape = 's32[1]{0}', space=sflag, size = 0x4, scoped, tag = 'scoped memory for tpu_custom_call.1']
    #allocation5 [shape = 'u8[8192]{0}', space=vmem, size = 0x2000, scoped, tag = 'input window, operand 1, single buffered']
    #allocation6 [shape = 's32[1]{0}', space=sflag, size = 0x4, scoped, tag = 'scoped memory for tpu_custom_call.1']
    #allocation7 [shape = 'u8[8192]{0}', space=vmem, size = 0x2000, scoped, tag = 'output window, operand 0, single buffered']
    %7 = vsyncpa [#allocation3], 0
    %8 = vsyncpa [#allocation6], 0
    %9 = vsyncpa [#allocation4], 0
    // Predicated region
    $region2: #{tpu_custom_call.1} parent=1 // pred_check
      _
    $region3: #{tpu_custom_call.1} parent=1 // pred_check_branch
      %11 = sbr.rel (0) target = $region5
    $region4: #{tpu_custom_call.1} parent=1 // pred_region
      %s13 = ssub.s32 256, 256
      %14 = vsyncadd [#allocation3], %s13
      %s16 = sshll.u32 [#allocation2], 4
      %s17 = int_to_ptr.vmem [resolvable:$true] %s16
      %19 = dma.hbm_to_vmem [thread:$0]  %s0, 256, %s17, [#allocation3]
    $region5: #{tpu_custom_call.1} parent=1 // pred_fallthru
      _
    // Predicated region
    $region6: #{tpu_custom_call.1} parent=1 // pred_check
      _
    $region7: #{tpu_custom_call.1} parent=1 // pred_check_branch
      %21 = sbr.rel (0) target = $region9
    $region8: #{tpu_custom_call.1} parent=1 // pred_region
      %s23 = ssub.s32 256, 256
      %24 = vsyncadd [#allocation6], %s23
      %s26 = sshll.u32 [#allocation5], 4
      %s27 = int_to_ptr.vmem [resolvable:$true] %s26
      %29 = dma.hbm_to_vmem [thread:$0]  %s1, 256, %s27, [#allocation6]
    $region9: #{tpu_custom_call.1} parent=1 // pred_fallthru
      _
    // Predicated region
    $region10: #{tpu_custom_call.1} parent=1 // pred_check
      _
    $region11: #{tpu_custom_call.1} parent=1 // pred_check_branch
      %31 = sbr.rel (0) target = $region13
    $region12: #{tpu_custom_call.1} parent=1 // pred_region
      %32 = dma.done [#allocation3], 256
    $region13: #{tpu_custom_call.1} parent=1 // pred_fallthru
      _
    // Predicated region
    $region14: #{tpu_custom_call.1} parent=1 // pred_check
      _
    $region15: #{tpu_custom_call.1} parent=1 // pred_check_branch
      %34 = sbr.rel (0) target = $region17
    $region16: #{tpu_custom_call.1} parent=1 // pred_region
      %35 = dma.done [#allocation6], 256
    $region17: #{tpu_custom_call.1} parent=1 // pred_fallthru
      _
    %v36 = vld [vmem:[#allocation2] sm:$0xff]
    %v37 = vld [vmem:[#allocation2 + $0x8] sm:$0xff]
    %v38 = vld [vmem:[#allocation5] ss:$2 sm:$0xff]
    %v40 = vlaneseq
    %v41 = vshrl.u32 %v40, 7
    %v42 = vsub.s32 0, %v41
    %v43 = vrot.slane %v38, %v42
    %v44 = vlaneseq
    %v45 = vshrl.u32 %v44, 7
    %v46 = vsub.s32 1, %v45
    %v47 = vrot.slane %v38, %v46
    %v48 = vlaneseq
    %v49 = vshrl.u32 %v48, 7
    %v50 = vsub.s32 2, %v49
    %v51 = vrot.slane %v38, %v50
    %v52 = vlaneseq
    %v53 = vshrl.u32 %v52, 7
    %v54 = vsub.s32 3, %v53
    %v55 = vrot.slane %v38, %v54
    %v56 = vlaneseq
    %v57 = vshrl.u32 %v56, 7
    %v58 = vsub.s32 4, %v57
    %v59 = vrot.slane %v38, %v58
    %v60 = vlaneseq
    %v61 = vshrl.u32 %v60, 7
    %v62 = vsub.s32 5, %v61
    %v63 = vrot.slane %v38, %v62
    %v64 = vlaneseq
    %v65 = vshrl.u32 %v64, 7
    %v66 = vsub.s32 6, %v65
    %v67 = vrot.slane %v38, %v66
    %v68 = vlaneseq
    %v69 = vshrl.u32 %v68, 7
    %v70 = vsub.s32 7, %v69
    %v71 = vrot.slane %v38, %v70
    %v72 = vcombine.low %v43, %v47
    %v73 = vcombine.low %v51, %v55
    %v75 = vunpack.c.l.s4 1983009808
    %v76 = vunpack.c.0.s8 %v75
    %v77 = vlaneseq
    %v78 = vshrl.u32 %v77, 7
    %v79 = vsub.s32 %v76, %v78
    %v80 = vrot.slane %v72, %v79
    %v82 = vunpack.c.l.s4 1983009808
    %v83 = vunpack.c.0.s8 %v82
    %v84 = vlaneseq
    %v85 = vshrl.u32 %v84, 7
    %v86 = vsub.s32 %v83, %v85
    %v87 = vrot.slane %v73, %v86
    %v88 = vcombine.low %v80, %v87
    %v89 = vcombine.low %v59, %v63
    %v90 = vcombine.low %v67, %v71
    %v92 = vunpack.c.l.s4 1983009808
    %v93 = vunpack.c.0.s8 %v92
    %v94 = vlaneseq
    %v95 = vshrl.u32 %v94, 7
    %v96 = vsub.s32 %v93, %v95
    %v97 = vrot.slane %v89, %v96
    %v99 = vunpack.c.l.s4 1983009808
    %v100 = vunpack.c.0.s8 %v99
    %v101 = vlaneseq
    %v102 = vshrl.u32 %v101, 7
    %v103 = vsub.s32 %v100, %v102
    %v104 = vrot.slane %v90, %v103
    %v105 = vcombine.low %v97, %v104
    %v108 = vmul.f32 %v36, %v88
    %v109 = vmul.f32 %v37, %v105
    %s110 = scalar_lea.vmem [#allocation5], 1
    %v111 = vld [vmem:[%s110] ss:$2 sm:$0xff]
    %v113 = vlaneseq
    %v114 = vshrl.u32 %v113, 7
    %v115 = vsub.s32 0, %v114
    %v116 = vrot.slane %v111, %v115
    %v117 = vlaneseq
    %v118 = vshrl.u32 %v117, 7
    %v119 = vsub.s32 1, %v118
    %v120 = vrot.slane %v111, %v119
    %v121 = vlaneseq
    %v122 = vshrl.u32 %v121, 7
    %v123 = vsub.s32 2, %v122
    %v124 = vrot.slane %v111, %v123
    %v125 = vlaneseq
    %v126 = vshrl.u32 %v125, 7
    %v127 = vsub.s32 3, %v126
    %v128 = vrot.slane %v111, %v127
    %v129 = vlaneseq
    %v130 = vshrl.u32 %v129, 7
    %v131 = vsub.s32 4, %v130
    %v132 = vrot.slane %v111, %v131
    %v133 = vlaneseq
    %v134 = vshrl.u32 %v133, 7
    %v135 = vsub.s32 5, %v134
    %v136 = vrot.slane %v111, %v135
    %v137 = vlaneseq
    %v138 = vshrl.u32 %v137, 7
    %v139 = vsub.s32 6, %v138
    %v140 = vrot.slane %v111, %v139
    %v141 = vlaneseq
    %v142 = vshrl.u32 %v141, 7
    %v143 = vsub.s32 7, %v142
    %v144 = vrot.slane %v111, %v143
    %v145 = vcombine.low %v116, %v120
    %v146 = vcombine.low %v124, %v128
    %v148 = vunpack.c.l.s4 1983009808
    %v149 = vunpack.c.0.s8 %v148
    %v150 = vlaneseq
    %v151 = vshrl.u32 %v150, 7
    %v152 = vsub.s32 %v149, %v151
    %v153 = vrot.slane %v145, %v152
    %v155 = vunpack.c.l.s4 1983009808
    %v156 = vunpack.c.0.s8 %v155
    %v157 = vlaneseq
    %v158 = vshrl.u32 %v157, 7
    %v159 = vsub.s32 %v156, %v158
    %v160 = vrot.slane %v146, %v159
    %v161 = vcombine.low %v153, %v160
    %v162 = vcombine.low %v132, %v136
    %v163 = vcombine.low %v140, %v144
    %v165 = vunpack.c.l.s4 1983009808
    %v166 = vunpack.c.0.s8 %v165
    %v167 = vlaneseq
    %v168 = vshrl.u32 %v167, 7
    %v169 = vsub.s32 %v166, %v168
    %v170 = vrot.slane %v162, %v169
    %v172 = vunpack.c.l.s4 1983009808
    %v173 = vunpack.c.0.s8 %v172
    %v174 = vlaneseq
    %v175 = vshrl.u32 %v174, 7
    %v176 = vsub.s32 %v173, %v175
    %v177 = vrot.slane %v163, %v176
    %v178 = vcombine.low %v170, %v177
    %v181 = vadd.f32 %v108, %v161
    %v182 = vadd.f32 %v109, %v178
    %183 = vst [vmem:[#allocation7] sm:$0xff] %v181
    %184 = vst [vmem:[#allocation7 + $0x8] sm:$0xff] %v182
    // Predicated region
    $region18: #{tpu_custom_call.1} parent=1 // pred_check
      _
    $region19: #{tpu_custom_call.1} parent=1 // pred_check_branch
      %186 = sbr.rel (0) target = $region21
    $region20: #{tpu_custom_call.1} parent=1 // pred_region
      %s188 = ssub.s32 256, 256
      %189 = vsyncadd [#allocation4], %s188
      %s191 = sshll.u32 [#allocation7], 4
      %s192 = int_to_ptr.vmem [resolvable:$true] %s191
      %194 = dma.vmem_to_hbm [thread:$0]  %s192, 256, %s2, [#allocation4]
    $region21: #{tpu_custom_call.1} parent=1 // pred_fallthru
      _
    // Predicated region
    $region22: #{tpu_custom_call.1} parent=1 // pred_check
      _
    $region23: #{tpu_custom_call.1} parent=1 // pred_check_branch
      %196 = sbr.rel (0) target = $region25
    $region24: #{tpu_custom_call.1} parent=1 // pred_region
      %197 = dma.done [#allocation4], 256
    $region25: #{tpu_custom_call.1} parent=1 // pred_fallthru
      _
    %198 = vsyncpa [#allocation3], 1
    %199 = vsyncpa [#allocation6], 1
    %200 = vsyncpa [#allocation4], 1

</llo_original>
